<compile_context>
chip_gen: v6e
topology: v6e:2x2x1
jax: 0.10.0
libtpu: 0.0.40
codegen_flags: <defaults>
</compile_context>

<pallas_src>
import functools

import jax
import jax.numpy as jnp
from jax.experimental import pallas as pl
from jax.experimental.pallas import tpu as pltpu


def _round_up(x, m):
    return ((x + m - 1) // m) * m


def _kernel(x_ref, w_in_ref, w2_ref, o_ref, *, slots, vocab):
    """One (token-tile, fertility-slot-group) block.

    x_ref:    (tm, Din_p)      [emb | fert | 1 | 0-pad], compute dtype
    w_in_ref: (Din_p, H_p)     fused [[w1],[fe@w1],[b1],[0]] with a constant-1
                               hidden unit at column H (bias-fold trick)
    w2_ref:   (H_p, slots*V)   [[w2 column chunk],[b2 chunk],[0]]
    o_ref:    (tm, slots*V)    log-probs, out dtype
    """
    # Hidden layer: both matmuls accumulate in f32 on the MXU; biases arrive
    # through the ones column / constant-1 hidden unit, so no VPU adds here.
    h = jnp.dot(x_ref[...], w_in_ref[...], preferred_element_type=jnp.float32)
    h = jnp.maximum(h, 0.0).astype(x_ref.dtype)          # back to MXU input dtype

    # Output projection for this column chunk: (tm, H_p) @ (H_p, slots*V).
    logits = jnp.dot(h, w2_ref[...], preferred_element_type=jnp.float32)

    # Per-fertility-slot stable log_softmax over the vocab axis (f32 math).
    # Slices are static and 128-lane aligned (V % 128 == 0) -> unmasked stores.
    V = vocab
    for f in range(slots):                               # slots is small; static unroll
        lf = logits[:, f * V:(f + 1) * V]
        m = jnp.max(lf, axis=-1, keepdims=True)
        z = lf - m
        lse = jnp.log(jnp.sum(jnp.exp(z), axis=-1, keepdims=True))
        o_ref[:, f * V:(f + 1) * V] = (z - lse).astype(o_ref.dtype)


def lexical_translation2_forward(
    embedded_input, input_mask, fertilities, params, *,
    maximum_fertility, vocab_size,
    tm=512,
    slots_per_block=None,
    compute_dtype=jnp.bfloat16,
    out_dtype=jnp.bfloat16,
    single_buffer_weights=True,
    vmem_budget_bytes=40 * 1024 * 1024,
):
    """embedded_input: (B,S,E); input_mask: (B,S) (unused by the reference
    forward); fertilities: (B,S,F+1). Returns (B,S,F+1,V) log-probs."""
    del input_mask  # reference forward never uses it
    B, S, E = embedded_input.shape
    F1 = maximum_fertility + 1
    V = vocab_size
    H = params["w1"].shape[1]
    M = B * S
    assert V % 128 == 0, "vocab_size must be a multiple of 128 for lane-dense slices/stores"

    # ---- fold the fertility sum and BOTH biases into the two matmuls --------
    #   (emb + fert @ fe) @ w1 + b1 == [emb | fert | 1] @ [[w1],[fe@w1],[b1]]
    #   relu(.) @ w2 + b2          == [relu(.) | 1] @ [[w2],[b2]]
    # where the trailing 1 of the hidden vector is produced by a padded hidden
    # unit whose only input weight is the ones column of x (relu(1) == 1).
    fe = params["fertility_embedding"].reshape(F1, E).astype(jnp.float32)
    w1 = params["w1"].astype(jnp.float32)                    # (E, H)
    b1 = params["b1"].reshape(H).astype(jnp.float32)
    w2 = params["w2"].astype(jnp.float32)                    # (H, F1*V)
    b2 = params["b2"].reshape(F1 * V).astype(jnp.float32)

    Din = E + F1 + 1                 # [emb | fert | 1]
    Din_p = _round_up(Din, 128)      # lane-dense K for the first matmul
    H_p = _round_up(H + 1, 128)      # hidden + constant-1 unit, lane-padded

    w_in = jnp.zeros((Din_p, H_p), jnp.float32)
    w_in = w_in.at[:E, :H].set(w1)
    w_in = w_in.at[E:E + F1, :H].set(fe @ w1)
    w_in = w_in.at[E + F1, :H].set(b1)                       # b1 via ones column
    w_in = w_in.at[E + F1, H].set(1.0)                       # constant-1 hidden unit
    w_in = w_in.astype(compute_dtype)

    w2p = jnp.zeros((H_p, F1 * V), jnp.float32)
    w2p = w2p.at[:H, :].set(w2)
    w2p = w2p.at[H, :].set(b2)                                # b2 via constant-1 unit
    w2p = w2p.astype(compute_dtype)

    # ---- pack input rows [emb | fert | 1 | 0-pad], pad token axis to tiles ---
    # NOTE: fertilities are cast to compute_dtype; exact for small counts.
    tm_eff = min(tm, _round_up(M, 16))
    n_rows = pl.cdiv(M, tm_eff)
    Mp = n_rows * tm_eff
    x = jnp.zeros((Mp, Din_p), compute_dtype)
    x = x.at[:M, :E].set(embedded_input.reshape(M, E).astype(compute_dtype))
    x = x.at[:M, E:E + F1].set(fertilities.reshape(M, F1).astype(compute_dtype))
    x = x.at[:M, E + F1].set(1.0)
    # Padded tail rows are all-zero -> finite log-probs; sliced off below.

    # ---- choose fertility slots per output block (vocab-column streaming) ---
    in_bytes = jnp.dtype(compute_dtype).itemsize
    out_bytes = jnp.dtype(out_dtype).itemsize
    if slots_per_block is None:
        slots_per_block = 1
        for d in range(F1, 0, -1):                 # prefer widest lane-dense block
            if F1 % d:
                continue
            cols = d * V
            need = (2 * tm_eff * Din_p * in_bytes          # x (double-buffered)
                    + Din_p * H_p * in_bytes               # w_in (single-buffered)
                    + 2 * H_p * cols * in_bytes            # w2 column chunk
                    + 2 * tm_eff * cols * out_bytes        # output block
                    + tm_eff * cols * 4 + tm_eff * H_p * 4)  # f32 logits / h temps
            if need <= vmem_budget_bytes:
                slots_per_block = d
                break
    assert F1 % slots_per_block == 0, "slots_per_block must divide maximum_fertility+1"
    cols_blk = slots_per_block * V
    n_cols = F1 // slots_per_block

    kernel = functools.partial(_kernel, slots=slots_per_block, vocab=V)

    def _call(use_buffered):
        # Single-buffer the grid-invariant weights (constant index_map) to
        # halve their VMEM residency; w2 only when it is not being streamed
        # over the column grid axis.
        wkw = {"pipeline_mode": pl.Buffered(1)} if use_buffered else {}
        w2kw = wkw if n_cols == 1 else {}
        in_specs = [
            pl.BlockSpec((tm_eff, Din_p), lambda i, j: (i, 0)),          # [emb|fert|1]
            pl.BlockSpec((Din_p, H_p), lambda i, j: (0, 0), **wkw),      # fused W1
            pl.BlockSpec((H_p, cols_blk), lambda i, j: (0, j), **w2kw),  # W2 chunk
        ]
        out_specs = pl.BlockSpec((tm_eff, cols_blk), lambda i, j: (i, j))
        return pl.pallas_call(
            kernel,
            out_shape=jax.ShapeDtypeStruct((Mp, F1 * V), out_dtype),
            grid_spec=pltpu.PrefetchScalarGridSpec(
                num_scalar_prefetch=0,
                grid=(n_rows, n_cols),       # column axis innermost: x stays resident
                in_specs=in_specs,
                out_specs=out_specs,
            ),
            compiler_params=pltpu.CompilerParams(
                dimension_semantics=("parallel", "parallel"),
                vmem_limit_bytes=64 * 1024 * 1024),
        )(x, w_in, w2p)

    if single_buffer_weights:
        try:
            out = _call(True)
        except Exception:
            # pl.Buffered(1) not supported by this jax/libtpu combination:
            # fall back to default double buffering (correctness unchanged).
            out = _call(False)
    else:
        out = _call(False)

    return out[:M].reshape(B, S, F1, V)


def _reference(embedded_input, fertilities, params, maximum_fertility, vocab_size):
    F1 = maximum_fertility + 1
    fe = params["fertility_embedding"]                      # (1,1,F+1,E)
    weighted = fe * fertilities[..., None]                  # (B,S,F+1,E)
    x = embedded_input + weighted.sum(axis=2)
    h = jnp.maximum(x @ params["w1"] + params["b1"], 0.0)
    o = h @ params["w2"] + params["b2"]
    B, S, _ = embedded_input.shape
    o = o.reshape(B, S, F1, vocab_size)
    return jax.nn.log_softmax(o, axis=-1)


if __name__ == "__main__":
    # small shapes consistent with the module
    B, S, E, H = 2, 8, 32, 32
    MAX_FERT = 3          # maximum_fertility -> F+1 = 4
    V = 128               # vocab size (target_namespace)
    F1 = MAX_FERT + 1

    key = jax.random.PRNGKey(0)
    ks = jax.random.split(key, 8)

    params = {
        # torch.randn([1,1,F+1,E])
        "fertility_embedding": jax.random.normal(ks[0], (1, 1, F1, E), jnp.float32),
        # FeedForward (assumed single hidden layer Linear(E->H) + ReLU)
        "w1": jax.random.normal(ks[1], (E, H), jnp.float32) * 0.1,
        "b1": jax.random.normal(ks[2], (H,), jnp.float32) * 0.1,
        # output_layer: Linear(H -> (F+1)*V)
        "w2": jax.random.normal(ks[3], (H, F1 * V), jnp.float32) * 0.1,
        "b2": jax.random.normal(ks[4], (F1 * V,), jnp.float32) * 0.1,
    }

    embedded_input = jax.random.normal(ks[5], (B, S, E), jnp.float32)
    input_mask = jnp.ones((B, S), jnp.int32)
    fertilities = jax.random.uniform(ks[6], (B, S, F1), jnp.float32)

    ref = _reference(embedded_input, fertilities, params, MAX_FERT, V)

    # 1) exact-precision path (f32 MXU inputs, f32 writeback) -> tight tolerance
    out_f32 = lexical_translation2_forward(
        embedded_input, input_mask, fertilities, params,
        maximum_fertility=MAX_FERT, vocab_size=V,
        compute_dtype=jnp.float32, out_dtype=jnp.float32)
    out_f32 = jax.block_until_ready(out_f32)
    assert out_f32.shape == (B, S, F1, V)
    assert jnp.allclose(out_f32, ref, atol=1e-4, rtol=1e-4)

    # 2) default fast path: bf16 MXU inputs + bf16 log-prob writeback
    out_fast = lexical_translation2_forward(
        embedded_input, input_mask, fertilities, params,
        maximum_fertility=MAX_FERT, vocab_size=V)
    out_fast = jax.block_until_ready(out_fast)
    assert out_fast.shape == (B, S, F1, V)
    assert out_fast.dtype == jnp.bfloat16
    assert jnp.max(jnp.abs(out_fast.astype(jnp.float32) - ref)) < 0.1

    # 3) vocab-streaming path (1 fertility slot per block): exercises the
    #    column grid axis used for large vocabularies / v7x VMEM budgets.
    out_stream = lexical_translation2_forward(
        embedded_input, input_mask, fertilities, params,
        maximum_fertility=MAX_FERT, vocab_size=V,
        slots_per_block=1)
    out_stream = jax.block_until_ready(out_stream)
    assert out_stream.shape == (B, S, F1, V)
    assert jnp.max(jnp.abs(out_stream.astype(jnp.float32) - ref)) < 0.1

    print("KERNEL_OK")
</pallas_src>

<mosaic_0001>
module attributes {stable_mosaic.version = 11 : i64} {
  func.func @_kernel(%arg0: i32, %arg1: i32, %arg2: memref<16x128xf32, #tpu.memory_space<vmem>>, %arg3: memref<128x128xf32, #tpu.memory_space<vmem>>, %arg4: memref<128x512xf32, #tpu.memory_space<vmem>>, %arg5: memref<16x512xf32, #tpu.memory_space<vmem>>) attributes {dimension_semantics = [#tpu.dimension_semantics<parallel>, #tpu.dimension_semantics<parallel>], iteration_bounds = array<i64: 1, 1>, scalar_prefetch = 0 : i64, scratch_operands = 0 : i64, tpu.core_type = #tpu.core_type<tc>, window_params = [{transform_indices = @transform_0, window_bounds = array<i64: 16, 128>}, {pipeline_mode = #tpu.pipeline_mode<synchronous>, transform_indices = @transform_1, window_bounds = array<i64: 128, 128>}, {pipeline_mode = #tpu.pipeline_mode<synchronous>, transform_indices = @transform_2, window_bounds = array<i64: 128, 512>}, {transform_indices = @transform_3, window_bounds = array<i64: 16, 512>}]} {
    %c0 = arith.constant 0 : index
    %c0_0 = arith.constant 0 : index
    %0 = vector.load %arg2[%c0, %c0_0] : memref<16x128xf32, #tpu.memory_space<vmem>>, vector<16x128xf32>
    %c0_1 = arith.constant 0 : index
    %c0_2 = arith.constant 0 : index
    %1 = vector.load %arg3[%c0_1, %c0_2] : memref<128x128xf32, #tpu.memory_space<vmem>>, vector<128x128xf32>
    %cst = arith.constant dense<0.000000e+00> : vector<16x128xf32>
    %2 = tpu.matmul %0, %1, %cst {dimension_numbers = #tpu.dot_dimension_numbers<[1], [0], [0], [1], [0, 0, 1, 1], [], []>} : vector<16x128xf32>, vector<128x128xf32>, vector<16x128xf32> -> vector<16x128xf32>
    %cst_3 = arith.constant 0.000000e+00 : f32
    %3 = vector.broadcast %cst_3 : f32 to vector<16x128xf32>
    %4 = arith.maximumf %2, %3 : vector<16x128xf32>
    %c0_4 = arith.constant 0 : index
    %c0_5 = arith.constant 0 : index
    %5 = vector.load %arg4[%c0_4, %c0_5] : memref<128x512xf32, #tpu.memory_space<vmem>>, vector<128x512xf32>
    %cst_6 = arith.constant dense<0.000000e+00> : vector<16x512xf32>
    %6 = tpu.matmul %4, %5, %cst_6 {dimension_numbers = #tpu.dot_dimension_numbers<[1], [0], [0], [1], [0, 0, 1, 1], [], []>} : vector<16x128xf32>, vector<128x512xf32>, vector<16x512xf32> -> vector<16x512xf32>
    %7 = vector.extract_strided_slice %6 {offsets = [0, 0], sizes = [16, 128], strides = [1, 1]} : vector<16x512xf32> to vector<16x128xf32>
    %cst_7 = arith.constant dense<0xFF800000> : vector<16xf32>
    %8 = vector.multi_reduction <maximumf>, %7, %cst_7 [1] : vector<16x128xf32> to vector<16xf32>
    %9 = vector.shape_cast %8 : vector<16xf32> to vector<16x1xf32>
    %10 = vector.broadcast %9 : vector<16x1xf32> to vector<16x128xf32>
    %11 = arith.subf %7, %10 : vector<16x128xf32>
    %12 = math.exp %11 : vector<16x128xf32>
    %cst_8 = arith.constant dense<0.000000e+00> : vector<16xf32>
    %13 = vector.multi_reduction <add>, %12, %cst_8 [1] : vector<16x128xf32> to vector<16xf32>
    %14 = vector.shape_cast %13 : vector<16xf32> to vector<16x1xf32>
    %15 = math.log %14 : vector<16x1xf32>
    %16 = vector.broadcast %15 : vector<16x1xf32> to vector<16x128xf32>
    %17 = arith.subf %11, %16 : vector<16x128xf32>
    %c0_9 = arith.constant 0 : index
    %c0_10 = arith.constant 0 : index
    %18 = vector.load %arg5[%c0_9, %c0_10] : memref<16x512xf32, #tpu.memory_space<vmem>>, vector<16x128xf32>
    tpu.vector_store %arg5[%c0_9, %c0_10], %17 {strides = array<i32>} : memref<16x512xf32, #tpu.memory_space<vmem>>, vector<16x128xf32>,
    %19 = vector.extract_strided_slice %6 {offsets = [0, 128], sizes = [16, 128], strides = [1, 1]} : vector<16x512xf32> to vector<16x128xf32>
    %cst_11 = arith.constant dense<0xFF800000> : vector<16xf32>
    %20 = vector.multi_reduction <maximumf>, %19, %cst_11 [1] : vector<16x128xf32> to vector<16xf32>
    %21 = vector.shape_cast %20 : vector<16xf32> to vector<16x1xf32>
    %22 = vector.broadcast %21 : vector<16x1xf32> to vector<16x128xf32>
    %23 = arith.subf %19, %22 : vector<16x128xf32>
    %24 = math.exp %23 : vector<16x128xf32>
    %cst_12 = arith.constant dense<0.000000e+00> : vector<16xf32>
    %25 = vector.multi_reduction <add>, %24, %cst_12 [1] : vector<16x128xf32> to vector<16xf32>
    %26 = vector.shape_cast %25 : vector<16xf32> to vector<16x1xf32>
    %27 = math.log %26 : vector<16x1xf32>
    %28 = vector.broadcast %27 : vector<16x1xf32> to vector<16x128xf32>
    %29 = arith.subf %23, %28 : vector<16x128xf32>
    %c0_13 = arith.constant 0 : index
    %c128 = arith.constant 128 : index
    %30 = vector.load %arg5[%c0_13, %c128] : memref<16x512xf32, #tpu.memory_space<vmem>>, vector<16x128xf32>
    tpu.vector_store %arg5[%c0_13, %c128], %29 {strides = array<i32>} : memref<16x512xf32, #tpu.memory_space<vmem>>, vector<16x128xf32>,
    %31 = vector.extract_strided_slice %6 {offsets = [0, 256], sizes = [16, 128], strides = [1, 1]} : vector<16x512xf32> to vector<16x128xf32>
    %cst_14 = arith.constant dense<0xFF800000> : vector<16xf32>
    %32 = vector.multi_reduction <maximumf>, %31, %cst_14 [1] : vector<16x128xf32> to vector<16xf32>
    %33 = vector.shape_cast %32 : vector<16xf32> to vector<16x1xf32>
    %34 = vector.broadcast %33 : vector<16x1xf32> to vector<16x128xf32>
    %35 = arith.subf %31, %34 : vector<16x128xf32>
    %36 = math.exp %35 : vector<16x128xf32>
    %cst_15 = arith.constant dense<0.000000e+00> : vector<16xf32>
    %37 = vector.multi_reduction <add>, %36, %cst_15 [1] : vector<16x128xf32> to vector<16xf32>
    %38 = vector.shape_cast %37 : vector<16xf32> to vector<16x1xf32>
    %39 = math.log %38 : vector<16x1xf32>
    %40 = vector.broadcast %39 : vector<16x1xf32> to vector<16x128xf32>
    %41 = arith.subf %35, %40 : vector<16x128xf32>
    %c0_16 = arith.constant 0 : index
    %c256 = arith.constant 256 : index
    %42 = vector.load %arg5[%c0_16, %c256] : memref<16x512xf32, #tpu.memory_space<vmem>>, vector<16x128xf32>
    tpu.vector_store %arg5[%c0_16, %c256], %41 {strides = array<i32>} : memref<16x512xf32, #tpu.memory_space<vmem>>, vector<16x128xf32>,
    %43 = vector.extract_strided_slice %6 {offsets = [0, 384], sizes = [16, 128], strides = [1, 1]} : vector<16x512xf32> to vector<16x128xf32>
    %cst_17 = arith.constant dense<0xFF800000> : vector<16xf32>
    %44 = vector.multi_reduction <maximumf>, %43, %cst_17 [1] : vector<16x128xf32> to vector<16xf32>
    %45 = vector.shape_cast %44 : vector<16xf32> to vector<16x1xf32>
    %46 = vector.broadcast %45 : vector<16x1xf32> to vector<16x128xf32>
    %47 = arith.subf %43, %46 : vector<16x128xf32>
    %48 = math.exp %47 : vector<16x128xf32>
    %cst_18 = arith.constant dense<0.000000e+00> : vector<16xf32>
    %49 = vector.multi_reduction <add>, %48, %cst_18 [1] : vector<16x128xf32> to vector<16xf32>
    %50 = vector.shape_cast %49 : vector<16xf32> to vector<16x1xf32>
    %51 = math.log %50 : vector<16x1xf32>
    %52 = vector.broadcast %51 : vector<16x1xf32> to vector<16x128xf32>
    %53 = arith.subf %47, %52 : vector<16x128xf32>
    %c0_19 = arith.constant 0 : index
    %c384 = arith.constant 384 : index
    %54 = vector.load %arg5[%c0_19, %c384] : memref<16x512xf32, #tpu.memory_space<vmem>>, vector<16x128xf32>
    tpu.vector_store %arg5[%c0_19, %c384], %53 {strides = array<i32>} : memref<16x512xf32, #tpu.memory_space<vmem>>, vector<16x128xf32>,
    return
  }
  func.func @transform_0(%arg0: i32, %arg1: i32) -> (i32, i32) {
    %c0_i32 = arith.constant 0 : i32
    %c0_i32_0 = arith.constant 0 : i32
    return %arg0, %c0_i32 : i32, i32
  }
  func.func @transform_1(%arg0: i32, %arg1: i32) -> (i32, i32) {
    %c0_i32 = arith.constant 0 : i32
    %c0_i32_0 = arith.constant 0 : i32
    %c0_i32_1 = arith.constant 0 : i32
    return %c0_i32, %c0_i32_0 : i32, i32
  }
  func.func @transform_2(%arg0: i32, %arg1: i32) -> (i32, i32) {
    %c0_i32 = arith.constant 0 : i32
    %c0_i32_0 = arith.constant 0 : i32
    return %c0_i32, %arg1 : i32, i32
  }
  func.func @transform_3(%arg0: i32, %arg1: i32) -> (i32, i32) {
    %c0_i32 = arith.constant 0 : i32
    return %arg0, %arg1 : i32, i32
  }
}

module attributes {stable_mosaic.version = 11 : i64} {
  func.func @_kernel(%arg0: i32, %arg1: i32, %arg2: memref<16x128xf32, #tpu.memory_space<vmem>>, %arg3: memref<128x128xf32, #tpu.memory_space<vmem>>, %arg4: memref<128x512xf32, #tpu.memory_space<vmem>>, %arg5: memref<16x512xf32, #tpu.memory_space<vmem>>) attributes {dimension_semantics = [#tpu.dimension_semantics<parallel>, #tpu.dimension_semantics<parallel>], iteration_bounds = array<i64: 1, 1>, scalar_prefetch = 0 : i64, scratch_operands = 0 : i64, tpu.core_type = #tpu.core_type<tc>, window_params = [{transform_indices = @transform_0, window_bounds = array<i64: 16, 128>}, {pipeline_mode = #tpu.pipeline_mode<synchronous>, transform_indices = @transform_1, window_bounds = array<i64: 128, 128>}, {transform_indices = @transform_2, window_bounds = array<i64: 128, 512>}, {transform_indices = @transform_3, window_bounds = array<i64: 16, 512>}]} {
    %c0 = arith.constant 0 : index
    %c0_0 = arith.constant 0 : index
    %0 = vector.load %arg2[%c0, %c0_0] : memref<16x128xf32, #tpu.memory_space<vmem>>, vector<16x128xf32>
    %c0_1 = arith.constant 0 : index
    %c0_2 = arith.constant 0 : index
    %1 = vector.load %arg3[%c0_1, %c0_2] : memref<128x128xf32, #tpu.memory_space<vmem>>, vector<128x128xf32>
    %cst = arith.constant dense<0.000000e+00> : vector<16x128xf32>
    %2 = tpu.matmul %0, %1, %cst {dimension_numbers = #tpu.dot_dimension_numbers<[1], [0], [0], [1], [0, 0, 1, 1], [], []>} : vector<16x128xf32>, vector<128x128xf32>, vector<16x128xf32> -> vector<16x128xf32>
    %cst_3 = arith.constant 0.000000e+00 : f32
    %3 = vector.broadcast %cst_3 : f32 to vector<16x128xf32>
    %4 = arith.maximumf %2, %3 : vector<16x128xf32>
    %c0_4 = arith.constant 0 : index
    %c0_5 = arith.constant 0 : index
    %5 = vector.load %arg4[%c0_4, %c0_5] : memref<128x512xf32, #tpu.memory_space<vmem>>, vector<128x512xf32>
    %cst_6 = arith.constant dense<0.000000e+00> : vector<16x512xf32>
    %6 = tpu.matmul %4, %5, %cst_6 {dimension_numbers = #tpu.dot_dimension_numbers<[1], [0], [0], [1], [0, 0, 1, 1], [], []>} : vector<16x128xf32>, vector<128x512xf32>, vector<16x512xf32> -> vector<16x512xf32>
    %7 = vector.extract_strided_slice %6 {offsets = [0, 0], sizes = [16, 128], strides = [1, 1]} : vector<16x512xf32> to vector<16x128xf32>
    %cst_7 = arith.constant dense<0xFF800000> : vector<16xf32>
    %8 = vector.multi_reduction <maximumf>, %7, %cst_7 [1] : vector<16x128xf32> to vector<16xf32>
    %9 = vector.shape_cast %8 : vector<16xf32> to vector<16x1xf32>
    %10 = vector.broadcast %9 : vector<16x1xf32> to vector<16x128xf32>
    %11 = arith.subf %7, %10 : vector<16x128xf32>
    %12 = math.exp %11 : vector<16x128xf32>
    %cst_8 = arith.constant dense<0.000000e+00> : vector<16xf32>
    %13 = vector.multi_reduction <add>, %12, %cst_8 [1] : vector<16x128xf32> to vector<16xf32>
    %14 = vector.shape_cast %13 : vector<16xf32> to vector<16x1xf32>
    %15 = math.log %14 : vector<16x1xf32>
    %16 = vector.broadcast %15 : vector<16x1xf32> to vector<16x128xf32>
    %17 = arith.subf %11, %16 : vector<16x128xf32>
    %c0_9 = arith.constant 0 : index
    %c0_10 = arith.constant 0 : index
    %18 = vector.load %arg5[%c0_9, %c0_10] : memref<16x512xf32, #tpu.memory_space<vmem>>, vector<16x128xf32>
    tpu.vector_store %arg5[%c0_9, %c0_10], %17 {strides = array<i32>} : memref<16x512xf32, #tpu.memory_space<vmem>>, vector<16x128xf32>,
    %19 = vector.extract_strided_slice %6 {offsets = [0, 128], sizes = [16, 128], strides = [1, 1]} : vector<16x512xf32> to vector<16x128xf32>
    %cst_11 = arith.constant dense<0xFF800000> : vector<16xf32>
    %20 = vector.multi_reduction <maximumf>, %19, %cst_11 [1] : vector<16x128xf32> to vector<16xf32>
    %21 = vector.shape_cast %20 : vector<16xf32> to vector<16x1xf32>
    %22 = vector.broadcast %21 : vector<16x1xf32> to vector<16x128xf32>
    %23 = arith.subf %19, %22 : vector<16x128xf32>
    %24 = math.exp %23 : vector<16x128xf32>
    %cst_12 = arith.constant dense<0.000000e+00> : vector<16xf32>
    %25 = vector.multi_reduction <add>, %24, %cst_12 [1] : vector<16x128xf32> to vector<16xf32>
    %26 = vector.shape_cast %25 : vector<16xf32> to vector<16x1xf32>
    %27 = math.log %26 : vector<16x1xf32>
    %28 = vector.broadcast %27 : vector<16x1xf32> to vector<16x128xf32>
    %29 = arith.subf %23, %28 : vector<16x128xf32>
    %c0_13 = arith.constant 0 : index
    %c128 = arith.constant 128 : index
    %30 = vector.load %arg5[%c0_13, %c128] : memref<16x512xf32, #tpu.memory_space<vmem>>, vector<16x128xf32>
    tpu.vector_store %arg5[%c0_13, %c128], %29 {strides = array<i32>} : memref<16x512xf32, #tpu.memory_space<vmem>>, vector<16x128xf32>,
    %31 = vector.extract_strided_slice %6 {offsets = [0, 256], sizes = [16, 128], strides = [1, 1]} : vector<16x512xf32> to vector<16x128xf32>
    %cst_14 = arith.constant dense<0xFF800000> : vector<16xf32>
    %32 = vector.multi_reduction <maximumf>, %31, %cst_14 [1] : vector<16x128xf32> to vector<16xf32>
    %33 = vector.shape_cast %32 : vector<16xf32> to vector<16x1xf32>
    %34 = vector.broadcast %33 : vector<16x1xf32> to vector<16x128xf32>
    %35 = arith.subf %31, %34 : vector<16x128xf32>
    %36 = math.exp %35 : vector<16x128xf32>
    %cst_15 = arith.constant dense<0.000000e+00> : vector<16xf32>
    %37 = vector.multi_reduction <add>, %36, %cst_15 [1] : vector<16x128xf32> to vector<16xf32>
    %38 = vector.shape_cast %37 : vector<16xf32> to vector<16x1xf32>
    %39 = math.log %38 : vector<16x1xf32>
    %40 = vector.broadcast %39 : vector<16x1xf32> to vector<16x128xf32>
    %41 = arith.subf %35, %40 : vector<16x128xf32>
    %c0_16 = arith.constant 0 : index
    %c256 = arith.constant 256 : index
    %42 = vector.load %arg5[%c0_16, %c256] : memref<16x512xf32, #tpu.memory_space<vmem>>, vector<16x128xf32>
    tpu.vector_store %arg5[%c0_16, %c256], %41 {strides = array<i32>} : memref<16x512xf32, #tpu.memory_space<vmem>>, vector<16x128xf32>,
    %43 = vector.extract_strided_slice %6 {offsets = [0, 384], sizes = [16, 128], strides = [1, 1]} : vector<16x512xf32> to vector<16x128xf32>
    %cst_17 = arith.constant dense<0xFF800000> : vector<16xf32>
    %44 = vector.multi_reduction <maximumf>, %43, %cst_17 [1] : vector<16x128xf32> to vector<16xf32>
    %45 = vector.shape_cast %44 : vector<16xf32> to vector<16x1xf32>
    %46 = vector.broadcast %45 : vector<16x1xf32> to vector<16x128xf32>
    %47 = arith.subf %43, %46 : vector<16x128xf32>
    %48 = math.exp %47 : vector<16x128xf32>
    %cst_18 = arith.constant dense<0.000000e+00> : vector<16xf32>
    %49 = vector.multi_reduction <add>, %48, %cst_18 [1] : vector<16x128xf32> to vector<16xf32>
    %50 = vector.shape_cast %49 : vector<16xf32> to vector<16x1xf32>
    %51 = math.log %50 : vector<16x1xf32>
    %52 = vector.broadcast %51 : vector<16x1xf32> to vector<16x128xf32>
    %53 = arith.subf %47, %52 : vector<16x128xf32>
    %c0_19 = arith.constant 0 : index
    %c384 = arith.constant 384 : index
    %54 = vector.load %arg5[%c0_19, %c384] : memref<16x512xf32, #tpu.memory_space<vmem>>, vector<16x128xf32>
    tpu.vector_store %arg5[%c0_19, %c384], %53 {strides = array<i32>} : memref<16x512xf32, #tpu.memory_space<vmem>>, vector<16x128xf32>,
    return
  }
  func.func @transform_0(%arg0: i32, %arg1: i32) -> (i32, i32) {
    %c0_i32 = arith.constant 0 : i32
    %c0_i32_0 = arith.constant 0 : i32
    return %arg0, %c0_i32 : i32, i32
  }
  func.func @transform_1(%arg0: i32, %arg1: i32) -> (i32, i32) {
    %c0_i32 = arith.constant 0 : i32
    %c0_i32_0 = arith.constant 0 : i32
    %c0_i32_1 = arith.constant 0 : i32
    return %c0_i32, %c0_i32_0 : i32, i32
  }
  func.func @transform_2(%arg0: i32, %arg1: i32) -> (i32, i32) {
    %c0_i32 = arith.constant 0 : i32
    %c0_i32_0 = arith.constant 0 : i32
    return %c0_i32, %arg1 : i32, i32
  }
  func.func @transform_3(%arg0: i32, %arg1: i32) -> (i32, i32) {
    %c0_i32 = arith.constant 0 : i32
    return %arg0, %arg1 : i32, i32
  }
}

</mosaic_0001>

<llo_original>
// kernel: tpu_custom_call.1
$region0: #{tpu_custom_call.1}
  #allocation0 [shape = 'u32[]', space=smem, size = 0x4, offset = 0x4, fixed_abs, tag = 'smem constant byte address 0x4 - core index']
  #allocation1 [shape = 'u32[144,128]{1,0:T(1,128)}', space=vmem, size = 0x12000, scoped, tag = 'internal scratch']
  %s0 = inlined_call_operand.hbm [shape: f32[16,128], index: 0, kind: input, shape index: {}]
  %s1 = inlined_call_operand.hbm [shape: f32[128,128], index: 1, kind: input, shape index: {}]
  %s2 = inlined_call_operand.hbm [shape: f32[128,512], index: 2, kind: input, shape index: {}]
  %s3 = inlined_call_operand.hbm [shape: f32[16,512], index: 3, kind: output, shape index: {}]
  %s4 = sld [smem:[#allocation0]]
  $region34: #{tpu_custom_call.1} parent=0
    _
  %s6 = ssub.s32 1, %s4
  %s7 = scalar_select 0, %s6, %s4
  $region1: #{tpu_custom_call.1} parent=0
    #allocation2 [shape = 'u8[8192]{0}', space=vmem, size = 0x2000, scoped, tag = 'input window, operand 0, single buffered']
    #allocation3 [shape = 's32[1]{0}', space=sflag, size = 0x4, scoped, tag = 'scoped memory for tpu_custom_call.1']
    #allocation4 [shape = 's32[1]{0}', space=sflag, size = 0x4, scoped, tag = 'scoped memory for tpu_custom_call.1']
    #allocation5 [shape = 'u8[65536]{0}', space=vmem, size = 0x10000, scoped, tag = 'input window, operand 1, single buffered']
    #allocation6 [shape = 's32[1]{0}', space=sflag, size = 0x4, scoped, tag = 'scoped memory for tpu_custom_call.1']
    #allocation7 [shape = 'u8[262144]{0}', space=vmem, size = 0x40000, scoped, tag = 'input window, operand 2, single buffered']
    #allocation8 [shape = 'u8[32768]{0}', space=vmem, size = 0x8000, scoped, tag = 'output window, operand 0, single buffered']
    %8 = vsyncpa [#allocation3], 0
    %9 = vsyncpa [#allocation6], 0
    %10 = vsyncpa [#allocation4], 0
    // Predicated region
    $region2: #{tpu_custom_call.1} parent=1 // pred_check
      _
    $region3: #{tpu_custom_call.1} parent=1 // pred_check_branch
      %12 = sbr.rel (0) target = $region5
    $region4: #{tpu_custom_call.1} parent=1 // pred_region
      %s14 = ssub.s32 256, 256
      %15 = vsyncadd [#allocation3], %s14
      %s16 = sshll.u32 [#allocation2], 4
      %s17 = int_to_ptr.vmem [resolvable:$true] %s16
      %22 = dma.hbm_to_vmem [thread:$0]  %s0, 256, %s17, [#allocation3], 128, 128, 8
    $region5: #{tpu_custom_call.1} parent=1 // pred_fallthru
      _
    // Predicated region
    $region6: #{tpu_custom_call.1} parent=1 // pred_check
      _
    $region7: #{tpu_custom_call.1} parent=1 // pred_check_branch
      %24 = sbr.rel (0) target = $region9
    $region8: #{tpu_custom_call.1} parent=1 // pred_region
      %s26 = ssub.s32 2048, 2048
      %27 = vsyncadd [#allocation6], %s26
      %s28 = sshll.u32 [#allocation5], 4
      %s29 = int_to_ptr.vmem [resolvable:$true] %s28
      %34 = dma.hbm_to_vmem [thread:$0]  %s1, 2048, %s29, [#allocation6], 128, 128, 8
    $region9: #{tpu_custom_call.1} parent=1 // pred_fallthru
      _
    // Predicated region
    $region10: #{tpu_custom_call.1} parent=1 // pred_check
      _
    $region11: #{tpu_custom_call.1} parent=1 // pred_check_branch
      %36 = sbr.rel (0) target = $region13
    $region12: #{tpu_custom_call.1} parent=1 // pred_region
      %s38 = ssub.s32 8192, 8192
      %39 = vsyncadd [#allocation6], %s38
      %s40 = sshll.u32 [#allocation7], 4
      %s41 = int_to_ptr.vmem [resolvable:$true] %s40
      %46 = dma.hbm_to_vmem [thread:$0]  %s2, 8192, %s41, [#allocation6], 512, 512, 32
    $region13: #{tpu_custom_call.1} parent=1 // pred_fallthru
      _
    // Predicated region
    $region14: #{tpu_custom_call.1} parent=1 // pred_check
      _
    $region15: #{tpu_custom_call.1} parent=1 // pred_check_branch
      %48 = sbr.rel (0) target = $region17
    $region16: #{tpu_custom_call.1} parent=1 // pred_region
      %49 = dma.done [#allocation3], 256
    $region17: #{tpu_custom_call.1} parent=1 // pred_fallthru
      _
    // Predicated region
    $region18: #{tpu_custom_call.1} parent=1 // pred_check
      _
    $region19: #{tpu_custom_call.1} parent=1 // pred_check_branch
      %51 = sbr.rel (0) target = $region21
    $region20: #{tpu_custom_call.1} parent=1 // pred_region
      %52 = dma.done [#allocation6], 2048
    $region21: #{tpu_custom_call.1} parent=1 // pred_fallthru
      _
    // Predicated region
    $region22: #{tpu_custom_call.1} parent=1 // pred_check
      _
    $region23: #{tpu_custom_call.1} parent=1 // pred_check_branch
      %54 = sbr.rel (0) target = $region25
    $region24: #{tpu_custom_call.1} parent=1 // pred_region
      %55 = dma.done [#allocation6], 8192
    $region25: #{tpu_custom_call.1} parent=1 // pred_fallthru
      _
    %v56 = vld [vmem:[#allocation2] sm:$0xff]
    %v57 = vld [vmem:[#allocation2 + $0x8] sm:$0xff]
    %v58 = vld [vmem:[#allocation5] sm:$0xff]
    %v59 = vld [vmem:[#allocation5 + $0x8] sm:$0xff]
    %v60 = vld [vmem:[#allocation5 + $0x10] sm:$0xff]
    %v61 = vld [vmem:[#allocation5 + $0x18] sm:$0xff]
    %v62 = vld [vmem:[#allocation5 + $0x20] sm:$0xff]
    %v63 = vld [vmem:[#allocation5 + $0x28] sm:$0xff]
    %v64 = vld [vmem:[#allocation5 + $0x30] sm:$0xff]
    %v65 = vld [vmem:[#allocation5 + $0x38] sm:$0xff]
    %v66 = vld [vmem:[#allocation5 + $0x40] sm:$0xff]
    %v67 = vld [vmem:[#allocation5 + $0x48] sm:$0xff]
    %v68 = vld [vmem:[#allocation5 + $0x50] sm:$0xff]
    %v69 = vld [vmem:[#allocation5 + $0x58] sm:$0xff]
    %v70 = vld [vmem:[#allocation5 + $0x60] sm:$0xff]
    %v71 = vld [vmem:[#allocation5 + $0x68] sm:$0xff]
    %v72 = vld [vmem:[#allocation5 + $0x70] sm:$0xff]
    %v73 = vld [vmem:[#allocation5 + $0x78] sm:$0xff]
    %74 = vmatprep.subr.mxu0 0.0
    %75 = vmatpush1.msra.mxu0 %v73
    %76 = vmatprep.subr.mxu0 0.0
    %77 = vmatpush1.msra.mxu0 %v72
    %78 = vmatprep.subr.mxu0 0.0
    %79 = vmatpush1.msra.mxu0 %v71
    %80 = vmatprep.subr.mxu0 0.0
    %81 = vmatpush1.msra.mxu0 %v70
    %82 = vmatprep.subr.mxu0 0.0
    %83 = vmatpush1.msra.mxu0 %v69
    %84 = vmatprep.subr.mxu0 0.0
    %85 = vmatpush1.msra.mxu0 %v68
    %86 = vmatprep.subr.mxu0 0.0
    %87 = vmatpush1.msra.mxu0 %v67
    %88 = vmatprep.subr.mxu0 0.0
    %89 = vmatpush1.msra.mxu0 %v66
    %90 = vmatprep.subr.mxu0 0.0
    %91 = vmatpush1.msra.mxu0 %v65
    %92 = vmatprep.subr.mxu0 0.0
    %93 = vmatpush1.msra.mxu0 %v64
    %94 = vmatprep.subr.mxu0 0.0
    %95 = vmatpush1.msra.mxu0 %v63
    %96 = vmatprep.subr.mxu0 0.0
    %97 = vmatpush1.msra.mxu0 %v62
    %98 = vmatprep.subr.mxu0 0.0
    %99 = vmatpush1.msra.mxu0 %v61
    %100 = vmatprep.subr.mxu0 0.0
    %101 = vmatpush1.msra.mxu0 %v60
    %102 = vmatprep.subr.mxu0 0.0
    %103 = vmatpush1.msra.mxu0 %v59
    %104 = vmatprep.subr.mxu0 0.0
    %105 = vmatpush1.msra.mxu0 %v58
    %106 = vmatprep.subr.mxu0 0.0
    %107 = vmatpush2.msra.mxu0 0.0
    %108 = vmatprep.subr.mxu0 0.0
    %109 = vmatpush2.msra.mxu0 0.0
    %110 = vmatprep.subr.mxu0 0.0
    %111 = vmatpush2.msra.mxu0 0.0
    %112 = vmatprep.subr.mxu0 0.0
    %113 = vmatpush2.msra.mxu0 0.0
    %114 = vmatprep.subr.mxu0 0.0
    %115 = vmatpush2.msra.mxu0 0.0
    %116 = vmatprep.subr.mxu0 0.0
    %117 = vmatpush2.msra.mxu0 0.0
    %118 = vmatprep.subr.mxu0 0.0
    %119 = vmatpush2.msra.mxu0 0.0
    %120 = vmatprep.subr.mxu0 0.0
    %121 = vmatpush2.msra.mxu0 0.0
    %122 = vmatprep.subr.mxu0 0.0
    %123 = vmatpush2.msra.mxu0 0.0
    %124 = vmatprep.subr.mxu0 0.0
    %125 = vmatpush2.msra.mxu0 0.0
    %126 = vmatprep.subr.mxu0 0.0
    %127 = vmatpush2.msra.mxu0 0.0
    %128 = vmatprep.subr.mxu0 0.0
    %129 = vmatpush2.msra.mxu0 0.0
    %130 = vmatprep.subr.mxu0 0.0
    %131 = vmatpush2.msra.mxu0 0.0
    %132 = vmatprep.subr.mxu0 0.0
    %133 = vmatpush2.msra.mxu0 0.0
    %134 = vmatprep.subr.mxu0 0.0
    %135 = vmatpush2.msra.mxu0 0.0
    %136 = vmatprep.subr.mxu0 0.0
    %137 = vmatpush2.msra.mxu0 0.0
    %138 = vmatprep.mubr.f32.mxu0 0.0
    %139 = vmatmul.mubr.f32.gmra.mxu0 %v56
    %v140 = vpop.f32.mrf.mxu0
    %v141 = vadd.f32 0.0, %v140
    %v142 = vpop.f32.mrf.mxu0
    %143 = vmatprep.mubr.f32.mxu0 0.0
    %144 = vmatmul.mubr.f32.gmra.mxu0 %v57
    %v145 = vpop.f32.mrf.mxu0
    %v146 = vadd.f32 0.0, %v145
    %v147 = vpop.f32.mrf.mxu0
    %148 = vdwg.mxu0
    %v149 = vmax.f32 %v141, 0.0
    %v150 = vmax.f32 %v146, 0.0
    %v151 = vld [vmem:[#allocation7] sm:$0xff]
    %v152 = vld [vmem:[#allocation7 + $0x8] sm:$0xff]
    %v153 = vld [vmem:[#allocation7 + $0x10] sm:$0xff]
    %v154 = vld [vmem:[#allocation7 + $0x18] sm:$0xff]
    %v155 = vld [vmem:[#allocation7 + $0x20] sm:$0xff]
    %v156 = vld [vmem:[#allocation7 + $0x28] sm:$0xff]
    %v157 = vld [vmem:[#allocation7 + $0x30] sm:$0xff]
    %v158 = vld [vmem:[#allocation7 + $0x38] sm:$0xff]
    %v159 = vld [vmem:[#allocation7 + $0x40] sm:$0xff]
    %v160 = vld [vmem:[#allocation7 + $0x48] sm:$0xff]
    %v161 = vld [vmem:[#allocation7 + $0x50] sm:$0xff]
    %v162 = vld [vmem:[#allocation7 + $0x58] sm:$0xff]
    %v163 = vld [vmem:[#allocation7 + $0x60] sm:$0xff]
    %v164 = vld [vmem:[#allocation7 + $0x68] sm:$0xff]
    %v165 = vld [vmem:[#allocation7 + $0x70] sm:$0xff]
    %v166 = vld [vmem:[#allocation7 + $0x78] sm:$0xff]
    %v167 = vld [vmem:[#allocation7 + $0x80] sm:$0xff]
    %v168 = vld [vmem:[#allocation7 + $0x88] sm:$0xff]
    %v169 = vld [vmem:[#allocation7 + $0x90] sm:$0xff]
    %v170 = vld [vmem:[#allocation7 + $0x98] sm:$0xff]
    %v171 = vld [vmem:[#allocation7 + $0xa0] sm:$0xff]
    %v172 = vld [vmem:[#allocation7 + $0xa8] sm:$0xff]
    %v173 = vld [vmem:[#allocation7 + $0xb0] sm:$0xff]
    %v174 = vld [vmem:[#allocation7 + $0xb8] sm:$0xff]
    %v175 = vld [vmem:[#allocation7 + $0xc0] sm:$0xff]
    %v176 = vld [vmem:[#allocation7 + $0xc8] sm:$0xff]
    %v177 = vld [vmem:[#allocation7 + $0xd0] sm:$0xff]
    %v178 = vld [vmem:[#allocation7 + $0xd8] sm:$0xff]
    %v179 = vld [vmem:[#allocation7 + $0xe0] sm:$0xff]
    %v180 = vld [vmem:[#allocation7 + $0xe8] sm:$0xff]
    %v181 = vld [vmem:[#allocation7 + $0xf0] sm:$0xff]
    %v182 = vld [vmem:[#allocation7 + $0xf8] sm:$0xff]
    %v183 = vld [vmem:[#allocation7 + $0x100] sm:$0xff]
    %v184 = vld [vmem:[#allocation7 + $0x108] sm:$0xff]
    %v185 = vld [vmem:[#allocation7 + $0x110] sm:$0xff]
    %v186 = vld [vmem:[#allocation7 + $0x118] sm:$0xff]
    %v187 = vld [vmem:[#allocation7 + $0x120] sm:$0xff]
    %v188 = vld [vmem:[#allocation7 + $0x128] sm:$0xff]
    %v189 = vld [vmem:[#allocation7 + $0x130] sm:$0xff]
    %v190 = vld [vmem:[#allocation7 + $0x138] sm:$0xff]
    %v191 = vld [vmem:[#allocation7 + $0x140] sm:$0xff]
    %v192 = vld [vmem:[#allocation7 + $0x148] sm:$0xff]
    %v193 = vld [vmem:[#allocation7 + $0x150] sm:$0xff]
    %v194 = vld [vmem:[#allocation7 + $0x158] sm:$0xff]
    %v195 = vld [vmem:[#allocation7 + $0x160] sm:$0xff]
    %v196 = vld [vmem:[#allocation7 + $0x168] sm:$0xff]
    %v197 = vld [vmem:[#allocation7 + $0x170] sm:$0xff]
    %v198 = vld [vmem:[#allocation7 + $0x178] sm:$0xff]
    %v199 = vld [vmem:[#allocation7 + $0x180] sm:$0xff]
    %v200 = vld [vmem:[#allocation7 + $0x188] sm:$0xff]
    %v201 = vld [vmem:[#allocation7 + $0x190] sm:$0xff]
    %v202 = vld [vmem:[#allocation7 + $0x198] sm:$0xff]
    %v203 = vld [vmem:[#allocation7 + $0x1a0] sm:$0xff]
    %v204 = vld [vmem:[#allocation7 + $0x1a8] sm:$0xff]
    %v205 = vld [vmem:[#allocation7 + $0x1b0] sm:$0xff]
    %v206 = vld [vmem:[#allocation7 + $0x1b8] sm:$0xff]
    %v207 = vld [vmem:[#allocation7 + $0x1c0] sm:$0xff]
    %v208 = vld [vmem:[#allocation7 + $0x1c8] sm:$0xff]
    %v209 = vld [vmem:[#allocation7 + $0x1d0] sm:$0xff]
    %v210 = vld [vmem:[#allocation7 + $0x1d8] sm:$0xff]
    %v211 = vld [vmem:[#allocation7 + $0x1e0] sm:$0xff]
    %v212 = vld [vmem:[#allocation7 + $0x1e8] sm:$0xff]
    %v213 = vld [vmem:[#allocation7 + $0x1f0] sm:$0xff]
    %v214 = vld [vmem:[#allocation7 + $0x1f8] sm:$0xff]
    %215 = vmatprep.subr.mxu0 %v212
    %216 = vmatpush1.msra.mxu0 %v211
    %217 = vmatprep.subr.mxu0 %v208
    %218 = vmatpush1.msra.mxu0 %v207
    %219 = vmatprep.subr.mxu0 %v204
    %220 = vmatpush1.msra.mxu0 %v203
    %221 = vmatprep.subr.mxu0 %v200
    %222 = vmatpush1.msra.mxu0 %v199
    %223 = vmatprep.subr.mxu0 %v196
    %224 = vmatpush1.msra.mxu0 %v195
    %225 = vmatprep.subr.mxu0 %v192
    %226 = vmatpush1.msra.mxu0 %v191
    %227 = vmatprep.subr.mxu0 %v188
    %228 = vmatpush1.msra.mxu0 %v187
    %229 = vmatprep.subr.mxu0 %v184
    %230 = vmatpush1.msra.mxu0 %v183
    %231 = vmatprep.subr.mxu0 %v180
    %232 = vmatpush1.msra.mxu0 %v179
    %233 = vmatprep.subr.mxu0 %v176
    %234 = vmatpush1.msra.mxu0 %v175
    %235 = vmatprep.subr.mxu0 %v172
    %236 = vmatpush1.msra.mxu0 %v171
    %237 = vmatprep.subr.mxu0 %v168
    %238 = vmatpush1.msra.mxu0 %v167
    %239 = vmatprep.subr.mxu0 %v164
    %240 = vmatpush1.msra.mxu0 %v163
    %241 = vmatprep.subr.mxu0 %v160
    %242 = vmatpush1.msra.mxu0 %v159
    %243 = vmatprep.subr.mxu0 %v156
    %244 = vmatpush1.msra.mxu0 %v155
    %245 = vmatprep.subr.mxu0 %v152
    %246 = vmatpush1.msra.mxu0 %v151
    %247 = vmatprep.subr.mxu0 0.0
    %248 = vmatpush2.msra.mxu0 0.0
    %249 = vmatprep.subr.mxu0 0.0
    %250 = vmatpush2.msra.mxu0 0.0
    %251 = vmatprep.subr.mxu0 0.0
    %252 = vmatpush2.msra.mxu0 0.0
    %253 = vmatprep.subr.mxu0 0.0
    %254 = vmatpush2.msra.mxu0 0.0
    %255 = vmatprep.subr.mxu0 0.0
    %256 = vmatpush2.msra.mxu0 0.0
    %257 = vmatprep.subr.mxu0 0.0
    %258 = vmatpush2.msra.mxu0 0.0
    %259 = vmatprep.subr.mxu0 0.0
    %260 = vmatpush2.msra.mxu0 0.0
    %261 = vmatprep.subr.mxu0 0.0
    %262 = vmatpush2.msra.mxu0 0.0
    %263 = vmatprep.subr.mxu0 0.0
    %264 = vmatpush2.msra.mxu0 0.0
    %265 = vmatprep.subr.mxu0 0.0
    %266 = vmatpush2.msra.mxu0 0.0
    %267 = vmatprep.subr.mxu0 0.0
    %268 = vmatpush2.msra.mxu0 0.0
    %269 = vmatprep.subr.mxu0 0.0
    %270 = vmatpush2.msra.mxu0 0.0
    %271 = vmatprep.subr.mxu0 0.0
    %272 = vmatpush2.msra.mxu0 0.0
    %273 = vmatprep.subr.mxu0 0.0
    %274 = vmatpush2.msra.mxu0 0.0
    %275 = vmatprep.subr.mxu0 0.0
    %276 = vmatpush2.msra.mxu0 0.0
    %277 = vmatprep.subr.mxu0 0.0
    %278 = vmatpush2.msra.mxu0 0.0
    %279 = vmatprep.mubr.f32.mxu0 0.0
    %280 = vmatmul.mubr.f32.gmra.mxu0 %v149
    %v281 = vpop.f32.mrf.mxu0
    %v282 = vadd.f32 0.0, %v281
    %v283 = vpop.f32.mrf.mxu0
    %v284 = vadd.f32 0.0, %v283
    %285 = vmatprep.mubr.f32.mxu0 0.0
    %286 = vmatmul.mubr.f32.gmra.mxu0 %v150
    %v287 = vpop.f32.mrf.mxu0
    %v288 = vadd.f32 0.0, %v287
    %v289 = vpop.f32.mrf.mxu0
    %v290 = vadd.f32 0.0, %v289
    %291 = vdwg.mxu0
    %292 = vmatprep.subr.mxu0 %v214
    %293 = vmatpush1.msra.mxu0 %v213
    %294 = vmatprep.subr.mxu0 %v210
    %295 = vmatpush1.msra.mxu0 %v209
    %296 = vmatprep.subr.mxu0 %v206
    %297 = vmatpush1.msra.mxu0 %v205
    %298 = vmatprep.subr.mxu0 %v202
    %299 = vmatpush1.msra.mxu0 %v201
    %300 = vmatprep.subr.mxu0 %v198
    %301 = vmatpush1.msra.mxu0 %v197
    %302 = vmatprep.subr.mxu0 %v194
    %303 = vmatpush1.msra.mxu0 %v193
    %304 = vmatprep.subr.mxu0 %v190
    %305 = vmatpush1.msra.mxu0 %v189
    %306 = vmatprep.subr.mxu0 %v186
    %307 = vmatpush1.msra.mxu0 %v185
    %308 = vmatprep.subr.mxu0 %v182
    %309 = vmatpush1.msra.mxu0 %v181
    %310 = vmatprep.subr.mxu0 %v178
    %311 = vmatpush1.msra.mxu0 %v177
    %312 = vmatprep.subr.mxu0 %v174
    %313 = vmatpush1.msra.mxu0 %v173
    %314 = vmatprep.subr.mxu0 %v170
    %315 = vmatpush1.msra.mxu0 %v169
    %316 = vmatprep.subr.mxu0 %v166
    %317 = vmatpush1.msra.mxu0 %v165
    %318 = vmatprep.subr.mxu0 %v162
    %319 = vmatpush1.msra.mxu0 %v161
    %320 = vmatprep.subr.mxu0 %v158
    %321 = vmatpush1.msra.mxu0 %v157
    %322 = vmatprep.subr.mxu0 %v154
    %323 = vmatpush1.msra.mxu0 %v153
    %324 = vmatprep.subr.mxu0 0.0
    %325 = vmatpush2.msra.mxu0 0.0
    %326 = vmatprep.subr.mxu0 0.0
    %327 = vmatpush2.msra.mxu0 0.0
    %328 = vmatprep.subr.mxu0 0.0
    %329 = vmatpush2.msra.mxu0 0.0
    %330 = vmatprep.subr.mxu0 0.0
    %331 = vmatpush2.msra.mxu0 0.0
    %332 = vmatprep.subr.mxu0 0.0
    %333 = vmatpush2.msra.mxu0 0.0
    %334 = vmatprep.subr.mxu0 0.0
    %335 = vmatpush2.msra.mxu0 0.0
    %336 = vmatprep.subr.mxu0 0.0
    %337 = vmatpush2.msra.mxu0 0.0
    %338 = vmatprep.subr.mxu0 0.0
    %339 = vmatpush2.msra.mxu0 0.0
    %340 = vmatprep.subr.mxu0 0.0
    %341 = vmatpush2.msra.mxu0 0.0
    %342 = vmatprep.subr.mxu0 0.0
    %343 = vmatpush2.msra.mxu0 0.0
    %344 = vmatprep.subr.mxu0 0.0
    %345 = vmatpush2.msra.mxu0 0.0
    %346 = vmatprep.subr.mxu0 0.0
    %347 = vmatpush2.msra.mxu0 0.0
    %348 = vmatprep.subr.mxu0 0.0
    %349 = vmatpush2.msra.mxu0 0.0
    %350 = vmatprep.subr.mxu0 0.0
    %351 = vmatpush2.msra.mxu0 0.0
    %352 = vmatprep.subr.mxu0 0.0
    %353 = vmatpush2.msra.mxu0 0.0
    %354 = vmatprep.subr.mxu0 0.0
    %355 = vmatpush2.msra.mxu0 0.0
    %356 = vmatprep.mubr.f32.mxu0 0.0
    %357 = vmatmul.mubr.f32.gmra.mxu0 %v149
    %v358 = vpop.f32.mrf.mxu0
    %v359 = vadd.f32 0.0, %v358
    %v360 = vpop.f32.mrf.mxu0
    %v361 = vadd.f32 0.0, %v360
    %362 = vmatprep.mubr.f32.mxu0 0.0
    %363 = vmatmul.mubr.f32.gmra.mxu0 %v150
    %v364 = vpop.f32.mrf.mxu0
    %v365 = vadd.f32 0.0, %v364
    %v366 = vpop.f32.mrf.mxu0
    %v367 = vadd.f32 0.0, %v366
    %368 = vdwg.mxu0
    %369 = vmax.xlane.f32.xlu0 %v282
    %v370 = vpop.xlane.xlu0 %369
    %371 = vmax.xlane.f32.xlu0 %v288
    %v372 = vpop.xlane.xlu0 %371
    %v373 = vsub.f32 %v282, %v370
    %v374 = vsub.f32 %v288, %v372
    %v375 = vmul.f32 %v373, 1.442695
    %v376 = vpow.pop %v375
    %v377 = vmul.f32 %v374, 1.442695
    %v378 = vpow.pop %v377
    %379 = vadd.xlane.f32.xlu0 %v376
    %v380 = vpop.xlane.xlu0 %379
    %381 = vadd.xlane.f32.xlu0 %v378
    %v382 = vpop.xlane.xlu0 %381
    %v383 = vlog2.pop %v380
    %v384 = vmul.f32 %v383, 0.6931472
    %v385 = vlog2.pop %v382
    %v386 = vmul.f32 %v385, 0.6931472
    %v387 = vsub.f32 %v373, %v384
    %v388 = vsub.f32 %v374, %v386
    %389 = vst [vmem:[#allocation8] sm:$0xff] %v387
    %390 = vst [vmem:[#allocation8 + $0x20] sm:$0xff] %v388
    %391 = vmax.xlane.f32.xlu0 %v284
    %v392 = vpop.xlane.xlu0 %391
    %393 = vmax.xlane.f32.xlu0 %v290
    %v394 = vpop.xlane.xlu0 %393
    %v395 = vsub.f32 %v284, %v392
    %v396 = vsub.f32 %v290, %v394
    %v397 = vmul.f32 %v395, 1.442695
    %v398 = vpow.pop %v397
    %v399 = vmul.f32 %v396, 1.442695
    %v400 = vpow.pop %v399
    %401 = vadd.xlane.f32.xlu0 %v398
    %v402 = vpop.xlane.xlu0 %401
    %403 = vadd.xlane.f32.xlu0 %v400
    %v404 = vpop.xlane.xlu0 %403
    %v405 = vlog2.pop %v402
    %v406 = vmul.f32 %v405, 0.6931472
    %v407 = vlog2.pop %v404
    %v408 = vmul.f32 %v407, 0.6931472
    %v409 = vsub.f32 %v395, %v406
    %v410 = vsub.f32 %v396, %v408
    %411 = vst [vmem:[#allocation8 + $0x8] sm:$0xff] %v409
    %412 = vst [vmem:[#allocation8 + $0x28] sm:$0xff] %v410
    %413 = vmax.xlane.f32.xlu0 %v359
    %v414 = vpop.xlane.xlu0 %413
    %415 = vmax.xlane.f32.xlu0 %v365
    %v416 = vpop.xlane.xlu0 %415
    %v417 = vsub.f32 %v359, %v414
    %v418 = vsub.f32 %v365, %v416
    %v419 = vmul.f32 %v417, 1.442695
    %v420 = vpow.pop %v419
    %v421 = vmul.f32 %v418, 1.442695
    %v422 = vpow.pop %v421
    %423 = vadd.xlane.f32.xlu0 %v420
    %v424 = vpop.xlane.xlu0 %423
    %425 = vadd.xlane.f32.xlu0 %v422
    %v426 = vpop.xlane.xlu0 %425
    %v427 = vlog2.pop %v424
    %v428 = vmul.f32 %v427, 0.6931472
    %v429 = vlog2.pop %v426
    %v430 = vmul.f32 %v429, 0.6931472
    %v431 = vsub.f32 %v417, %v428
    %v432 = vsub.f32 %v418, %v430
    %433 = vst [vmem:[#allocation8 + $0x10] sm:$0xff] %v431
    %434 = vst [vmem:[#allocation8 + $0x30] sm:$0xff] %v432
    %435 = vmax.xlane.f32.xlu0 %v361
    %v436 = vpop.xlane.xlu0 %435
    %437 = vmax.xlane.f32.xlu0 %v367
    %v438 = vpop.xlane.xlu0 %437
    %v439 = vsub.f32 %v361, %v436
    %v440 = vsub.f32 %v367, %v438
    %v441 = vmul.f32 %v439, 1.442695
    %v442 = vpow.pop %v441
    %v443 = vmul.f32 %v440, 1.442695
    %v444 = vpow.pop %v443
    %445 = vadd.xlane.f32.xlu0 %v442
    %v446 = vpop.xlane.xlu0 %445
    %447 = vadd.xlane.f32.xlu0 %v444
    %v448 = vpop.xlane.xlu0 %447
    %v449 = vlog2.pop %v446
    %v450 = vmul.f32 %v449, 0.6931472
    %v451 = vlog2.pop %v448
    %v452 = vmul.f32 %v451, 0.6931472
    %v453 = vsub.f32 %v439, %v450
    %v454 = vsub.f32 %v440, %v452
    %455 = vst [vmem:[#allocation8 + $0x18] sm:$0xff] %v453
    %456 = vst [vmem:[#allocation8 + $0x38] sm:$0xff] %v454
    // Predicated region
    $region26: #{tpu_custom_call.1} parent=1 // pred_check
      _
    $region27: #{tpu_custom_call.1} parent=1 // pred_check_branch
      %458 = sbr.rel (0) target = $region29
    $region28: #{tpu_custom_call.1} parent=1 // pred_region
      %s460 = ssub.s32 1024, 1024
      %461 = vsyncadd [#allocation4], %s460
      %s462 = sshll.u32 [#allocation8], 4
      %s463 = int_to_ptr.vmem [resolvable:$true] %s462
      %468 = dma.vmem_to_hbm [thread:$0]  %s463, 1024, %s3, [#allocation4], 512, 512, 32
    $region29: #{tpu_custom_call.1} parent=1 // pred_fallthru
      _
    // Predicated region
    $region30: #{tpu_custom_call.1} parent=1 // pred_check
      _
    $region31: #{tpu_custom_call.1} parent=1 // pred_check_branch
      %470 = sbr.rel (0) target = $region33
    $region32: #{tpu_custom_call.1} parent=1 // pred_region
      %471 = dma.done [#allocation4], 1024
    $region33: #{tpu_custom_call.1} parent=1 // pred_fallthru
      _
    %472 = vsyncpa [#allocation3], 1
    %473 = vsyncpa [#allocation6], 1
    %474 = vsyncpa [#allocation4], 1

// kernel: tpu_custom_call.1
$region0: #{tpu_custom_call.1}
  #allocation0 [shape = 'u32[]', space=smem, size = 0x4, offset = 0x4, fixed_abs, tag = 'smem constant byte address 0x4 - core index']
  #allocation1 [shape = 'u32[144,128]{1,0:T(1,128)}', space=vmem, size = 0x12000, scoped, tag = 'internal scratch']
  %s0 = inlined_call_operand.hbm [shape: f32[16,128], index: 0, kind: input, shape index: {}]
  %s1 = inlined_call_operand.hbm [shape: f32[128,128], index: 1, kind: input, shape index: {}]
  %s2 = inlined_call_operand.hbm [shape: f32[128,512], index: 2, kind: input, shape index: {}]
  %s3 = inlined_call_operand.hbm [shape: f32[16,512], index: 3, kind: output, shape index: {}]
  %s4 = sld [smem:[#allocation0]]
  $region34: #{tpu_custom_call.1} parent=0
    _
  %s6 = ssub.s32 1, %s4
  %s7 = scalar_select 0, %s6, %s4
  $region1: #{tpu_custom_call.1} parent=0
    #allocation2 [shape = 'u8[8192]{0}', space=vmem, size = 0x2000, scoped, tag = 'input window, operand 0, single buffered']
    #allocation3 [shape = 's32[1]{0}', space=sflag, size = 0x4, scoped, tag = 'scoped memory for tpu_custom_call.1']
    #allocation4 [shape = 's32[1]{0}', space=sflag, size = 0x4, scoped, tag = 'scoped memory for tpu_custom_call.1']
    #allocation5 [shape = 'u8[65536]{0}', space=vmem, size = 0x10000, scoped, tag = 'input window, operand 1, single buffered']
    #allocation6 [shape = 's32[1]{0}', space=sflag, size = 0x4, scoped, tag = 'scoped memory for tpu_custom_call.1']
    #allocation7 [shape = 'u8[262144]{0}', space=vmem, size = 0x40000, scoped, tag = 'input window, operand 2, single buffered']
    #allocation8 [shape = 'u8[32768]{0}', space=vmem, size = 0x8000, scoped, tag = 'output window, operand 0, single buffered']
    %8 = vsyncpa [#allocation3], 0
    %9 = vsyncpa [#allocation6], 0
    %10 = vsyncpa [#allocation4], 0
    // Predicated region
    $region2: #{tpu_custom_call.1} parent=1 // pred_check
      _
    $region3: #{tpu_custom_call.1} parent=1 // pred_check_branch
      %12 = sbr.rel (0) target = $region5
    $region4: #{tpu_custom_call.1} parent=1 // pred_region
      %s14 = ssub.s32 256, 256
      %15 = vsyncadd [#allocation3], %s14
      %s16 = sshll.u32 [#allocation2], 4
      %s17 = int_to_ptr.vmem [resolvable:$true] %s16
      %22 = dma.hbm_to_vmem [thread:$0]  %s0, 256, %s17, [#allocation3], 128, 128, 8
    $region5: #{tpu_custom_call.1} parent=1 // pred_fallthru
      _
    // Predicated region
    $region6: #{tpu_custom_call.1} parent=1 // pred_check
      _
    $region7: #{tpu_custom_call.1} parent=1 // pred_check_branch
      %24 = sbr.rel (0) target = $region9
    $region8: #{tpu_custom_call.1} parent=1 // pred_region
      %s26 = ssub.s32 2048, 2048
      %27 = vsyncadd [#allocation6], %s26
      %s28 = sshll.u32 [#allocation5], 4
      %s29 = int_to_ptr.vmem [resolvable:$true] %s28
      %34 = dma.hbm_to_vmem [thread:$0]  %s1, 2048, %s29, [#allocation6], 128, 128, 8
    $region9: #{tpu_custom_call.1} parent=1 // pred_fallthru
      _
    // Predicated region
    $region10: #{tpu_custom_call.1} parent=1 // pred_check
      _
    $region11: #{tpu_custom_call.1} parent=1 // pred_check_branch
      %36 = sbr.rel (0) target = $region13
    $region12: #{tpu_custom_call.1} parent=1 // pred_region
      %s38 = ssub.s32 8192, 8192
      %39 = vsyncadd [#allocation6], %s38
      %s40 = sshll.u32 [#allocation7], 4
      %s41 = int_to_ptr.vmem [resolvable:$true] %s40
      %46 = dma.hbm_to_vmem [thread:$0]  %s2, 8192, %s41, [#allocation6], 512, 512, 32
    $region13: #{tpu_custom_call.1} parent=1 // pred_fallthru
      _
    // Predicated region
    $region14: #{tpu_custom_call.1} parent=1 // pred_check
      _
    $region15: #{tpu_custom_call.1} parent=1 // pred_check_branch
      %48 = sbr.rel (0) target = $region17
    $region16: #{tpu_custom_call.1} parent=1 // pred_region
      %49 = dma.done [#allocation3], 256
    $region17: #{tpu_custom_call.1} parent=1 // pred_fallthru
      _
    // Predicated region
    $region18: #{tpu_custom_call.1} parent=1 // pred_check
      _
    $region19: #{tpu_custom_call.1} parent=1 // pred_check_branch
      %51 = sbr.rel (0) target = $region21
    $region20: #{tpu_custom_call.1} parent=1 // pred_region
      %52 = dma.done [#allocation6], 2048
    $region21: #{tpu_custom_call.1} parent=1 // pred_fallthru
      _
    // Predicated region
    $region22: #{tpu_custom_call.1} parent=1 // pred_check
      _
    $region23: #{tpu_custom_call.1} parent=1 // pred_check_branch
      %54 = sbr.rel (0) target = $region25
    $region24: #{tpu_custom_call.1} parent=1 // pred_region
      %55 = dma.done [#allocation6], 8192
    $region25: #{tpu_custom_call.1} parent=1 // pred_fallthru
      _
    %v56 = vld [vmem:[#allocation2] sm:$0xff]
    %v57 = vld [vmem:[#allocation2 + $0x8] sm:$0xff]
    %v58 = vld [vmem:[#allocation5] sm:$0xff]
    %v59 = vld [vmem:[#allocation5 + $0x8] sm:$0xff]
    %v60 = vld [vmem:[#allocation5 + $0x10] sm:$0xff]
    %v61 = vld [vmem:[#allocation5 + $0x18] sm:$0xff]
    %v62 = vld [vmem:[#allocation5 + $0x20] sm:$0xff]
    %v63 = vld [vmem:[#allocation5 + $0x28] sm:$0xff]
    %v64 = vld [vmem:[#allocation5 + $0x30] sm:$0xff]
    %v65 = vld [vmem:[#allocation5 + $0x38] sm:$0xff]
    %v66 = vld [vmem:[#allocation5 + $0x40] sm:$0xff]
    %v67 = vld [vmem:[#allocation5 + $0x48] sm:$0xff]
    %v68 = vld [vmem:[#allocation5 + $0x50] sm:$0xff]
    %v69 = vld [vmem:[#allocation5 + $0x58] sm:$0xff]
    %v70 = vld [vmem:[#allocation5 + $0x60] sm:$0xff]
    %v71 = vld [vmem:[#allocation5 + $0x68] sm:$0xff]
    %v72 = vld [vmem:[#allocation5 + $0x70] sm:$0xff]
    %v73 = vld [vmem:[#allocation5 + $0x78] sm:$0xff]
    %74 = vmatprep.subr.mxu0 0.0
    %75 = vmatpush1.msra.mxu0 %v73
    %76 = vmatprep.subr.mxu0 0.0
    %77 = vmatpush1.msra.mxu0 %v72
    %78 = vmatprep.subr.mxu0 0.0
    %79 = vmatpush1.msra.mxu0 %v71
    %80 = vmatprep.subr.mxu0 0.0
    %81 = vmatpush1.msra.mxu0 %v70
    %82 = vmatprep.subr.mxu0 0.0
    %83 = vmatpush1.msra.mxu0 %v69
    %84 = vmatprep.subr.mxu0 0.0
    %85 = vmatpush1.msra.mxu0 %v68
    %86 = vmatprep.subr.mxu0 0.0
    %87 = vmatpush1.msra.mxu0 %v67
    %88 = vmatprep.subr.mxu0 0.0
    %89 = vmatpush1.msra.mxu0 %v66
    %90 = vmatprep.subr.mxu0 0.0
    %91 = vmatpush1.msra.mxu0 %v65
    %92 = vmatprep.subr.mxu0 0.0
    %93 = vmatpush1.msra.mxu0 %v64
    %94 = vmatprep.subr.mxu0 0.0
    %95 = vmatpush1.msra.mxu0 %v63
    %96 = vmatprep.subr.mxu0 0.0
    %97 = vmatpush1.msra.mxu0 %v62
    %98 = vmatprep.subr.mxu0 0.0
    %99 = vmatpush1.msra.mxu0 %v61
    %100 = vmatprep.subr.mxu0 0.0
    %101 = vmatpush1.msra.mxu0 %v60
    %102 = vmatprep.subr.mxu0 0.0
    %103 = vmatpush1.msra.mxu0 %v59
    %104 = vmatprep.subr.mxu0 0.0
    %105 = vmatpush1.msra.mxu0 %v58
    %106 = vmatprep.subr.mxu0 0.0
    %107 = vmatpush2.msra.mxu0 0.0
    %108 = vmatprep.subr.mxu0 0.0
    %109 = vmatpush2.msra.mxu0 0.0
    %110 = vmatprep.subr.mxu0 0.0
    %111 = vmatpush2.msra.mxu0 0.0
    %112 = vmatprep.subr.mxu0 0.0
    %113 = vmatpush2.msra.mxu0 0.0
    %114 = vmatprep.subr.mxu0 0.0
    %115 = vmatpush2.msra.mxu0 0.0
    %116 = vmatprep.subr.mxu0 0.0
    %117 = vmatpush2.msra.mxu0 0.0
    %118 = vmatprep.subr.mxu0 0.0
    %119 = vmatpush2.msra.mxu0 0.0
    %120 = vmatprep.subr.mxu0 0.0
    %121 = vmatpush2.msra.mxu0 0.0
    %122 = vmatprep.subr.mxu0 0.0
    %123 = vmatpush2.msra.mxu0 0.0
    %124 = vmatprep.subr.mxu0 0.0
    %125 = vmatpush2.msra.mxu0 0.0
    %126 = vmatprep.subr.mxu0 0.0
    %127 = vmatpush2.msra.mxu0 0.0
    %128 = vmatprep.subr.mxu0 0.0
    %129 = vmatpush2.msra.mxu0 0.0
    %130 = vmatprep.subr.mxu0 0.0
    %131 = vmatpush2.msra.mxu0 0.0
    %132 = vmatprep.subr.mxu0 0.0
    %133 = vmatpush2.msra.mxu0 0.0
    %134 = vmatprep.subr.mxu0 0.0
    %135 = vmatpush2.msra.mxu0 0.0
    %136 = vmatprep.subr.mxu0 0.0
    %137 = vmatpush2.msra.mxu0 0.0
    %138 = vmatprep.mubr.f32.mxu0 0.0
    %139 = vmatmul.mubr.f32.gmra.mxu0 %v56
    %v140 = vpop.f32.mrf.mxu0
    %v141 = vadd.f32 0.0, %v140
    %v142 = vpop.f32.mrf.mxu0
    %143 = vmatprep.mubr.f32.mxu0 0.0
    %144 = vmatmul.mubr.f32.gmra.mxu0 %v57
    %v145 = vpop.f32.mrf.mxu0
    %v146 = vadd.f32 0.0, %v145
    %v147 = vpop.f32.mrf.mxu0
    %148 = vdwg.mxu0
    %v149 = vmax.f32 %v141, 0.0
    %v150 = vmax.f32 %v146, 0.0
    %v151 = vld [vmem:[#allocation7] sm:$0xff]
    %v152 = vld [vmem:[#allocation7 + $0x8] sm:$0xff]
    %v153 = vld [vmem:[#allocation7 + $0x10] sm:$0xff]
    %v154 = vld [vmem:[#allocation7 + $0x18] sm:$0xff]
    %v155 = vld [vmem:[#allocation7 + $0x20] sm:$0xff]
    %v156 = vld [vmem:[#allocation7 + $0x28] sm:$0xff]
    %v157 = vld [vmem:[#allocation7 + $0x30] sm:$0xff]
    %v158 = vld [vmem:[#allocation7 + $0x38] sm:$0xff]
    %v159 = vld [vmem:[#allocation7 + $0x40] sm:$0xff]
    %v160 = vld [vmem:[#allocation7 + $0x48] sm:$0xff]
    %v161 = vld [vmem:[#allocation7 + $0x50] sm:$0xff]
    %v162 = vld [vmem:[#allocation7 + $0x58] sm:$0xff]
    %v163 = vld [vmem:[#allocation7 + $0x60] sm:$0xff]
    %v164 = vld [vmem:[#allocation7 + $0x68] sm:$0xff]
    %v165 = vld [vmem:[#allocation7 + $0x70] sm:$0xff]
    %v166 = vld [vmem:[#allocation7 + $0x78] sm:$0xff]
    %v167 = vld [vmem:[#allocation7 + $0x80] sm:$0xff]
    %v168 = vld [vmem:[#allocation7 + $0x88] sm:$0xff]
    %v169 = vld [vmem:[#allocation7 + $0x90] sm:$0xff]
    %v170 = vld [vmem:[#allocation7 + $0x98] sm:$0xff]
    %v171 = vld [vmem:[#allocation7 + $0xa0] sm:$0xff]
    %v172 = vld [vmem:[#allocation7 + $0xa8] sm:$0xff]
    %v173 = vld [vmem:[#allocation7 + $0xb0] sm:$0xff]
    %v174 = vld [vmem:[#allocation7 + $0xb8] sm:$0xff]
    %v175 = vld [vmem:[#allocation7 + $0xc0] sm:$0xff]
    %v176 = vld [vmem:[#allocation7 + $0xc8] sm:$0xff]
    %v177 = vld [vmem:[#allocation7 + $0xd0] sm:$0xff]
    %v178 = vld [vmem:[#allocation7 + $0xd8] sm:$0xff]
    %v179 = vld [vmem:[#allocation7 + $0xe0] sm:$0xff]
    %v180 = vld [vmem:[#allocation7 + $0xe8] sm:$0xff]
    %v181 = vld [vmem:[#allocation7 + $0xf0] sm:$0xff]
    %v182 = vld [vmem:[#allocation7 + $0xf8] sm:$0xff]
    %v183 = vld [vmem:[#allocation7 + $0x100] sm:$0xff]
    %v184 = vld [vmem:[#allocation7 + $0x108] sm:$0xff]
    %v185 = vld [vmem:[#allocation7 + $0x110] sm:$0xff]
    %v186 = vld [vmem:[#allocation7 + $0x118] sm:$0xff]
    %v187 = vld [vmem:[#allocation7 + $0x120] sm:$0xff]
    %v188 = vld [vmem:[#allocation7 + $0x128] sm:$0xff]
    %v189 = vld [vmem:[#allocation7 + $0x130] sm:$0xff]
    %v190 = vld [vmem:[#allocation7 + $0x138] sm:$0xff]
    %v191 = vld [vmem:[#allocation7 + $0x140] sm:$0xff]
    %v192 = vld [vmem:[#allocation7 + $0x148] sm:$0xff]
    %v193 = vld [vmem:[#allocation7 + $0x150] sm:$0xff]
    %v194 = vld [vmem:[#allocation7 + $0x158] sm:$0xff]
    %v195 = vld [vmem:[#allocation7 + $0x160] sm:$0xff]
    %v196 = vld [vmem:[#allocation7 + $0x168] sm:$0xff]
    %v197 = vld [vmem:[#allocation7 + $0x170] sm:$0xff]
    %v198 = vld [vmem:[#allocation7 + $0x178] sm:$0xff]
    %v199 = vld [vmem:[#allocation7 + $0x180] sm:$0xff]
    %v200 = vld [vmem:[#allocation7 + $0x188] sm:$0xff]
    %v201 = vld [vmem:[#allocation7 + $0x190] sm:$0xff]
    %v202 = vld [vmem:[#allocation7 + $0x198] sm:$0xff]
    %v203 = vld [vmem:[#allocation7 + $0x1a0] sm:$0xff]
    %v204 = vld [vmem:[#allocation7 + $0x1a8] sm:$0xff]
    %v205 = vld [vmem:[#allocation7 + $0x1b0] sm:$0xff]
    %v206 = vld [vmem:[#allocation7 + $0x1b8] sm:$0xff]
    %v207 = vld [vmem:[#allocation7 + $0x1c0] sm:$0xff]
    %v208 = vld [vmem:[#allocation7 + $0x1c8] sm:$0xff]
    %v209 = vld [vmem:[#allocation7 + $0x1d0] sm:$0xff]
    %v210 = vld [vmem:[#allocation7 + $0x1d8] sm:$0xff]
    %v211 = vld [vmem:[#allocation7 + $0x1e0] sm:$0xff]
    %v212 = vld [vmem:[#allocation7 + $0x1e8] sm:$0xff]
    %v213 = vld [vmem:[#allocation7 + $0x1f0] sm:$0xff]
    %v214 = vld [vmem:[#allocation7 + $0x1f8] sm:$0xff]
    %215 = vmatprep.subr.mxu0 %v212
    %216 = vmatpush1.msra.mxu0 %v211
    %217 = vmatprep.subr.mxu0 %v208
    %218 = vmatpush1.msra.mxu0 %v207
    %219 = vmatprep.subr.mxu0 %v204
    %220 = vmatpush1.msra.mxu0 %v203
    %221 = vmatprep.subr.mxu0 %v200
    %222 = vmatpush1.msra.mxu0 %v199
    %223 = vmatprep.subr.mxu0 %v196
    %224 = vmatpush1.msra.mxu0 %v195
    %225 = vmatprep.subr.mxu0 %v192
    %226 = vmatpush1.msra.mxu0 %v191
    %227 = vmatprep.subr.mxu0 %v188
    %228 = vmatpush1.msra.mxu0 %v187
    %229 = vmatprep.subr.mxu0 %v184
    %230 = vmatpush1.msra.mxu0 %v183
    %231 = vmatprep.subr.mxu0 %v180
    %232 = vmatpush1.msra.mxu0 %v179
    %233 = vmatprep.subr.mxu0 %v176
    %234 = vmatpush1.msra.mxu0 %v175
    %235 = vmatprep.subr.mxu0 %v172
    %236 = vmatpush1.msra.mxu0 %v171
    %237 = vmatprep.subr.mxu0 %v168
    %238 = vmatpush1.msra.mxu0 %v167
    %239 = vmatprep.subr.mxu0 %v164
    %240 = vmatpush1.msra.mxu0 %v163
    %241 = vmatprep.subr.mxu0 %v160
    %242 = vmatpush1.msra.mxu0 %v159
    %243 = vmatprep.subr.mxu0 %v156
    %244 = vmatpush1.msra.mxu0 %v155
    %245 = vmatprep.subr.mxu0 %v152
    %246 = vmatpush1.msra.mxu0 %v151
    %247 = vmatprep.subr.mxu0 0.0
    %248 = vmatpush2.msra.mxu0 0.0
    %249 = vmatprep.subr.mxu0 0.0
    %250 = vmatpush2.msra.mxu0 0.0
    %251 = vmatprep.subr.mxu0 0.0
    %252 = vmatpush2.msra.mxu0 0.0
    %253 = vmatprep.subr.mxu0 0.0
    %254 = vmatpush2.msra.mxu0 0.0
    %255 = vmatprep.subr.mxu0 0.0
    %256 = vmatpush2.msra.mxu0 0.0
    %257 = vmatprep.subr.mxu0 0.0
    %258 = vmatpush2.msra.mxu0 0.0
    %259 = vmatprep.subr.mxu0 0.0
    %260 = vmatpush2.msra.mxu0 0.0
    %261 = vmatprep.subr.mxu0 0.0
    %262 = vmatpush2.msra.mxu0 0.0
    %263 = vmatprep.subr.mxu0 0.0
    %264 = vmatpush2.msra.mxu0 0.0
    %265 = vmatprep.subr.mxu0 0.0
    %266 = vmatpush2.msra.mxu0 0.0
    %267 = vmatprep.subr.mxu0 0.0
    %268 = vmatpush2.msra.mxu0 0.0
    %269 = vmatprep.subr.mxu0 0.0
    %270 = vmatpush2.msra.mxu0 0.0
    %271 = vmatprep.subr.mxu0 0.0
    %272 = vmatpush2.msra.mxu0 0.0
    %273 = vmatprep.subr.mxu0 0.0
    %274 = vmatpush2.msra.mxu0 0.0
    %275 = vmatprep.subr.mxu0 0.0
    %276 = vmatpush2.msra.mxu0 0.0
    %277 = vmatprep.subr.mxu0 0.0
    %278 = vmatpush2.msra.mxu0 0.0
    %279 = vmatprep.mubr.f32.mxu0 0.0
    %280 = vmatmul.mubr.f32.gmra.mxu0 %v149
    %v281 = vpop.f32.mrf.mxu0
    %v282 = vadd.f32 0.0, %v281
    %v283 = vpop.f32.mrf.mxu0
    %v284 = vadd.f32 0.0, %v283
    %285 = vmatprep.mubr.f32.mxu0 0.0
    %286 = vmatmul.mubr.f32.gmra.mxu0 %v150
    %v287 = vpop.f32.mrf.mxu0
    %v288 = vadd.f32 0.0, %v287
    %v289 = vpop.f32.mrf.mxu0
    %v290 = vadd.f32 0.0, %v289
    %291 = vdwg.mxu0
    %292 = vmatprep.subr.mxu0 %v214
    %293 = vmatpush1.msra.mxu0 %v213
    %294 = vmatprep.subr.mxu0 %v210
    %295 = vmatpush1.msra.mxu0 %v209
    %296 = vmatprep.subr.mxu0 %v206
    %297 = vmatpush1.msra.mxu0 %v205
    %298 = vmatprep.subr.mxu0 %v202
    %299 = vmatpush1.msra.mxu0 %v201
    %300 = vmatprep.subr.mxu0 %v198
    %301 = vmatpush1.msra.mxu0 %v197
    %302 = vmatprep.subr.mxu0 %v194
    %303 = vmatpush1.msra.mxu0 %v193
    %304 = vmatprep.subr.mxu0 %v190
    %305 = vmatpush1.msra.mxu0 %v189
    %306 = vmatprep.subr.mxu0 %v186
    %307 = vmatpush1.msra.mxu0 %v185
    %308 = vmatprep.subr.mxu0 %v182
    %309 = vmatpush1.msra.mxu0 %v181
    %310 = vmatprep.subr.mxu0 %v178
    %311 = vmatpush1.msra.mxu0 %v177
    %312 = vmatprep.subr.mxu0 %v174
    %313 = vmatpush1.msra.mxu0 %v173
    %314 = vmatprep.subr.mxu0 %v170
    %315 = vmatpush1.msra.mxu0 %v169
    %316 = vmatprep.subr.mxu0 %v166
    %317 = vmatpush1.msra.mxu0 %v165
    %318 = vmatprep.subr.mxu0 %v162
    %319 = vmatpush1.msra.mxu0 %v161
    %320 = vmatprep.subr.mxu0 %v158
    %321 = vmatpush1.msra.mxu0 %v157
    %322 = vmatprep.subr.mxu0 %v154
    %323 = vmatpush1.msra.mxu0 %v153
    %324 = vmatprep.subr.mxu0 0.0
    %325 = vmatpush2.msra.mxu0 0.0
    %326 = vmatprep.subr.mxu0 0.0
    %327 = vmatpush2.msra.mxu0 0.0
    %328 = vmatprep.subr.mxu0 0.0
    %329 = vmatpush2.msra.mxu0 0.0
    %330 = vmatprep.subr.mxu0 0.0
    %331 = vmatpush2.msra.mxu0 0.0
    %332 = vmatprep.subr.mxu0 0.0
    %333 = vmatpush2.msra.mxu0 0.0
    %334 = vmatprep.subr.mxu0 0.0
    %335 = vmatpush2.msra.mxu0 0.0
    %336 = vmatprep.subr.mxu0 0.0
    %337 = vmatpush2.msra.mxu0 0.0
    %338 = vmatprep.subr.mxu0 0.0
    %339 = vmatpush2.msra.mxu0 0.0
    %340 = vmatprep.subr.mxu0 0.0
    %341 = vmatpush2.msra.mxu0 0.0
    %342 = vmatprep.subr.mxu0 0.0
    %343 = vmatpush2.msra.mxu0 0.0
    %344 = vmatprep.subr.mxu0 0.0
    %345 = vmatpush2.msra.mxu0 0.0
    %346 = vmatprep.subr.mxu0 0.0
    %347 = vmatpush2.msra.mxu0 0.0
    %348 = vmatprep.subr.mxu0 0.0
    %349 = vmatpush2.msra.mxu0 0.0
    %350 = vmatprep.subr.mxu0 0.0
    %351 = vmatpush2.msra.mxu0 0.0
    %352 = vmatprep.subr.mxu0 0.0
    %353 = vmatpush2.msra.mxu0 0.0
    %354 = vmatprep.subr.mxu0 0.0
    %355 = vmatpush2.msra.mxu0 0.0
    %356 = vmatprep.mubr.f32.mxu0 0.0
    %357 = vmatmul.mubr.f32.gmra.mxu0 %v149
    %v358 = vpop.f32.mrf.mxu0
    %v359 = vadd.f32 0.0, %v358
    %v360 = vpop.f32.mrf.mxu0
    %v361 = vadd.f32 0.0, %v360
    %362 = vmatprep.mubr.f32.mxu0 0.0
    %363 = vmatmul.mubr.f32.gmra.mxu0 %v150
    %v364 = vpop.f32.mrf.mxu0
    %v365 = vadd.f32 0.0, %v364
    %v366 = vpop.f32.mrf.mxu0
    %v367 = vadd.f32 0.0, %v366
    %368 = vdwg.mxu0
    %369 = vmax.xlane.f32.xlu0 %v282
    %v370 = vpop.xlane.xlu0 %369
    %371 = vmax.xlane.f32.xlu0 %v288
    %v372 = vpop.xlane.xlu0 %371
    %v373 = vsub.f32 %v282, %v370
    %v374 = vsub.f32 %v288, %v372
    %v375 = vmul.f32 %v373, 1.442695
    %v376 = vpow.pop %v375
    %v377 = vmul.f32 %v374, 1.442695
    %v378 = vpow.pop %v377
    %379 = vadd.xlane.f32.xlu0 %v376
    %v380 = vpop.xlane.xlu0 %379
    %381 = vadd.xlane.f32.xlu0 %v378
    %v382 = vpop.xlane.xlu0 %381
    %v383 = vlog2.pop %v380
    %v384 = vmul.f32 %v383, 0.6931472
    %v385 = vlog2.pop %v382
    %v386 = vmul.f32 %v385, 0.6931472
    %v387 = vsub.f32 %v373, %v384
    %v388 = vsub.f32 %v374, %v386
    %389 = vst [vmem:[#allocation8] sm:$0xff] %v387
    %390 = vst [vmem:[#allocation8 + $0x20] sm:$0xff] %v388
    %391 = vmax.xlane.f32.xlu0 %v284
    %v392 = vpop.xlane.xlu0 %391
    %393 = vmax.xlane.f32.xlu0 %v290
    %v394 = vpop.xlane.xlu0 %393
    %v395 = vsub.f32 %v284, %v392
    %v396 = vsub.f32 %v290, %v394
    %v397 = vmul.f32 %v395, 1.442695
    %v398 = vpow.pop %v397
    %v399 = vmul.f32 %v396, 1.442695
    %v400 = vpow.pop %v399
    %401 = vadd.xlane.f32.xlu0 %v398
    %v402 = vpop.xlane.xlu0 %401
    %403 = vadd.xlane.f32.xlu0 %v400
    %v404 = vpop.xlane.xlu0 %403
    %v405 = vlog2.pop %v402
    %v406 = vmul.f32 %v405, 0.6931472
    %v407 = vlog2.pop %v404
    %v408 = vmul.f32 %v407, 0.6931472
    %v409 = vsub.f32 %v395, %v406
    %v410 = vsub.f32 %v396, %v408
    %411 = vst [vmem:[#allocation8 + $0x8] sm:$0xff] %v409
    %412 = vst [vmem:[#allocation8 + $0x28] sm:$0xff] %v410
    %413 = vmax.xlane.f32.xlu0 %v359
    %v414 = vpop.xlane.xlu0 %413
    %415 = vmax.xlane.f32.xlu0 %v365
    %v416 = vpop.xlane.xlu0 %415
    %v417 = vsub.f32 %v359, %v414
    %v418 = vsub.f32 %v365, %v416
    %v419 = vmul.f32 %v417, 1.442695
    %v420 = vpow.pop %v419
    %v421 = vmul.f32 %v418, 1.442695
    %v422 = vpow.pop %v421
    %423 = vadd.xlane.f32.xlu0 %v420
    %v424 = vpop.xlane.xlu0 %423
    %425 = vadd.xlane.f32.xlu0 %v422
    %v426 = vpop.xlane.xlu0 %425
    %v427 = vlog2.pop %v424
    %v428 = vmul.f32 %v427, 0.6931472
    %v429 = vlog2.pop %v426
    %v430 = vmul.f32 %v429, 0.6931472
    %v431 = vsub.f32 %v417, %v428
    %v432 = vsub.f32 %v418, %v430
    %433 = vst [vmem:[#allocation8 + $0x10] sm:$0xff] %v431
    %434 = vst [vmem:[#allocation8 + $0x30] sm:$0xff] %v432
    %435 = vmax.xlane.f32.xlu0 %v361
    %v436 = vpop.xlane.xlu0 %435
    %437 = vmax.xlane.f32.xlu0 %v367
    %v438 = vpop.xlane.xlu0 %437
    %v439 = vsub.f32 %v361, %v436
    %v440 = vsub.f32 %v367, %v438
    %v441 = vmul.f32 %v439, 1.442695
    %v442 = vpow.pop %v441
    %v443 = vmul.f32 %v440, 1.442695
    %v444 = vpow.pop %v443
    %445 = vadd.xlane.f32.xlu0 %v442
    %v446 = vpop.xlane.xlu0 %445
    %447 = vadd.xlane.f32.xlu0 %v444
    %v448 = vpop.xlane.xlu0 %447
    %v449 = vlog2.pop %v446
    %v450 = vmul.f32 %v449, 0.6931472
    %v451 = vlog2.pop %v448
    %v452 = vmul.f32 %v451, 0.6931472
    %v453 = vsub.f32 %v439, %v450
    %v454 = vsub.f32 %v440, %v452
    %455 = vst [vmem:[#allocation8 + $0x18] sm:$0xff] %v453
    %456 = vst [vmem:[#allocation8 + $0x38] sm:$0xff] %v454
    // Predicated region
    $region26: #{tpu_custom_call.1} parent=1 // pred_check
      _
    $region27: #{tpu_custom_call.1} parent=1 // pred_check_branch
      %458 = sbr.rel (0) target = $region29
    $region28: #{tpu_custom_call.1} parent=1 // pred_region
      %s460 = ssub.s32 1024, 1024
      %461 = vsyncadd [#allocation4], %s460
      %s462 = sshll.u32 [#allocation8], 4
      %s463 = int_to_ptr.vmem [resolvable:$true] %s462
      %468 = dma.vmem_to_hbm [thread:$0]  %s463, 1024, %s3, [#allocation4], 512, 512, 32
    $region29: #{tpu_custom_call.1} parent=1 // pred_fallthru
      _
    // Predicated region
    $region30: #{tpu_custom_call.1} parent=1 // pred_check
      _
    $region31: #{tpu_custom_call.1} parent=1 // pred_check_branch
      %470 = sbr.rel (0) target = $region33
    $region32: #{tpu_custom_call.1} parent=1 // pred_region
      %471 = dma.done [#allocation4], 1024
    $region33: #{tpu_custom_call.1} parent=1 // pred_fallthru
      _
    %472 = vsyncpa [#allocation3], 1
    %473 = vsyncpa [#allocation6], 1
    %474 = vsyncpa [#allocation4], 1

</llo_original>
